<compile_context>
chip_gen: v7x
topology: tpu7x:2x2x1
jax: 0.10.0
libtpu: 0.0.40
codegen_flags: <defaults>
</compile_context>

<pallas_src>
import numpy as np
import jax
import jax.numpy as jnp
from jax.experimental import pallas as pl
from jax.experimental.pallas import tpu as pltpu

F = 32            # n_atom_basis
H1 = F // 2       # out_s1 MLP hidden : 32 -> 16 -> 2
H2 = F            # out_s2 MLP hidden : 64 -> 32 -> 3
OUT_S1 = 2        # outdim_s + 1
OUT_S2 = 3        # m_max_order == 2 -> outdim_s_ = 3
OUT_V = 3         # sum(arange(m_max_order) + 1) = 1 + 2
HID = H1 + H2     # 48, fused hidden width
SOUT = OUT_S1 + OUT_S2   # 5, fused scalar-head width
OUT_W = 1 + 3 + 9 + 1    # 14 output rows: [M0 | M1(3) | M2 row-major(9) | pooled]


def _swish(x):
    return x * jax.nn.sigmoid(x)


# ----------------------------------------------------------------------------
# Kernel (feature-major: rows = features, lanes = atoms)
# ----------------------------------------------------------------------------
def readout_ml2_kernel(x_ref, wA1_ref, wA2_ref, bA_ref, wB_ref, bB_ref,
                       wv_ref, out_ref):
    # x tile: (128, T) = [feat(32) ; fv_x(32) ; fv_y(32) ; fv_z(32)], T atoms on lanes.
    feat = x_ref[:F, :]                      # (32, T)
    fv = x_ref[F:, :]                        # (96, T)  all three spatial planes
    fvx = fv[:F]
    fvy = fv[F:2 * F]
    fvz = fv[2 * F:]

    # |feat_v| over the spatial axis — full 128-lane occupancy on the VPU.
    norm_v = jnp.sqrt(fvx * fvx + fvy * fvy + fvz * fvz)          # (32, T)

    # ---- fused out_s1 + out_s2 MLPs, W^T @ X (matmul N-dim = atoms) --------
    # Two MXU pushes instead of lane-concatenating [feat, |feat_v|].
    h = _swish(jnp.dot(wA1_ref[...], feat, preferred_element_type=jnp.float32)
               + jnp.dot(wA2_ref[...], norm_v, preferred_element_type=jnp.float32)
               + bA_ref[...])                                      # (48, T)
    s = (jnp.dot(wB_ref[...], h, preferred_element_type=jnp.float32)
         + bB_ref[...])                                            # (5, T)

    # ---- out_v: Dense(F -> 3, no bias) on each spatial plane, one matmul ---
    # Row 3*c + a of v == v[:, channel c, spatial a] (atoms on lanes).
    v = jnp.dot(wv_ref[...], fv, preferred_element_type=jnp.float32)   # (9, T)

    s_pool = s[0:1]          # s[:, :outdim_s]  (pooled column)
    m0 = s[1:2]              # M0 = s[:, outdim_s]
    s2_0 = s[2:3]
    s2_1 = s[3:4]
    s2_2 = s[4:5]

    v0 = [v[a:a + 1] for a in range(3)]          # channel 0
    v1 = [v[3 + a:4 + a] for a in range(3)]      # channel 1
    v2 = [v[6 + a:7 + a] for a in range(3)]      # channel 2

    # M1[n, a] = s2[n, 0] * v[n, 0, a]   — lane-dense (1, T) rows.
    m1 = [s2_0 * v0[a] for a in range(3)]

    # M2[n, i, j] = delta_ij * s2[n,1]
    #               + s2[n,2] * (v[n,1,i]*v[n,2,j] + v[n,1,j]*v[n,2,i])
    # Symmetric: 6 unique products, mirror the rest.
    prod = {}
    for i in range(3):
        for j in range(i, 3):
            prod[(i, j)] = v1[i] * v2[j] + v1[j] * v2[i]
    m2 = []
    for i in range(3):
        for j in range(3):
            row = s2_2 * prod[(i, j) if i <= j else (j, i)]
            if i == j:
                row = row + s2_1
            m2.append(row)

    # Single unmasked, lane-dense store of the whole per-atom output slab.
    out_ref[...] = jnp.concatenate([m0] + m1 + m2 + [s_pool], axis=0)   # (14, T)


# ----------------------------------------------------------------------------
# Wrapper
# ----------------------------------------------------------------------------
def fuse_params(p):
    """One-time weight repack: fused block-diagonal MLPs + folded out_v,
    all pre-transposed for the feature-major (W^T @ X) kernel."""
    wA1 = jnp.zeros((F, HID), jnp.float32)          # feat rows
    wA1 = wA1.at[:, :H1].set(p["w1a"])              # out_s1 layer-1
    wA1 = wA1.at[:, H1:].set(p["w2a"][:F])          # out_s2 layer-1 (feat part)
    wA2 = jnp.zeros((F, HID), jnp.float32)          # |feat_v| rows (out_s2 only)
    wA2 = wA2.at[:, H1:].set(p["w2a"][F:])
    bA = jnp.concatenate([p["b1a"], p["b2a"]], axis=1)          # (1, 48)

    wB = jnp.zeros((HID, SOUT), jnp.float32)
    wB = wB.at[:H1, :OUT_S1].set(p["w1b"])
    wB = wB.at[H1:, OUT_S1:].set(p["w2b"])
    bB = jnp.concatenate([p["b1b"], p["b2b"]], axis=1)          # (1, 5)

    # out_v folded for the packed [fv_x|fv_y|fv_z] slab: output row 3*c + a
    # applies wv[:, c] to spatial plane a.
    wv9 = jnp.zeros((3 * F, 9), jnp.float32)
    for a in range(3):
        for c in range(3):
            wv9 = wv9.at[a * F:(a + 1) * F, 3 * c + a].set(p["wv"][:, c])

    return {"wA1_t": wA1.T, "wA2_t": wA2.T, "bA_t": bA.T,
            "wB_t": wB.T, "bB_t": bB.T, "wv9_t": wv9.T}


def pack_inputs(feat, feat_v):
    """Producer-side layout: (128, N) = [feat ; fv_x ; fv_y ; fv_z], atoms on lanes.
    In production the producer should emit this directly (packing here costs an
    extra HBM copy of the largest input)."""
    fv_sm = jnp.transpose(feat_v, (2, 1, 0)).reshape(3 * F, feat.shape[0])
    return jnp.concatenate([feat.T, fv_sm], axis=0)


def readout_ml2(x_packed, graph_idx, num_graphs, fused, *, tile_n=1024):
    """x_packed: (128, N) f32 packed feature-major slab; graph_idx: (N,) i32."""
    N = x_packed.shape[1]
    # Tile sizing: per-atom traffic is ~512 B in / 56 B out, so 1024-2048-row
    # tiles keep the ~0.35 us fixed grid-step overhead hidden behind DMA while
    # the double-buffered working set stays ~2-4 MiB (far under VMEM on
    # v5e/v6e/v7x).  Keep at least 2 grid steps when N allows so v7x's two
    # TensorCores both get work ("parallel" axis).
    if N <= tile_n:
        tile_n = N                                   # single full-width block
    else:
        tile_n = max(128, (tile_n // 128) * 128)     # lane-aligned tile
    grid = (pl.cdiv(N, tile_n),)                     # ragged tail handled by Pallas
                                                     # (no wrapper-side jnp.pad copy)

    out = pl.pallas_call(
        readout_ml2_kernel,
        out_shape=jax.ShapeDtypeStruct((OUT_W, N), jnp.float32),
        grid=grid,
        in_specs=[
            pl.BlockSpec((4 * F, tile_n), lambda i: (0, i)),   # packed features
            pl.BlockSpec((HID, F), lambda i: (0, 0)),          # wA1^T (resident)
            pl.BlockSpec((HID, F), lambda i: (0, 0)),          # wA2^T
            pl.BlockSpec((HID, 1), lambda i: (0, 0)),          # bA^T
            pl.BlockSpec((SOUT, HID), lambda i: (0, 0)),       # wB^T
            pl.BlockSpec((SOUT, 1), lambda i: (0, 0)),         # bB^T
            pl.BlockSpec((9, 3 * F), lambda i: (0, 0)),        # folded out_v^T
        ],
        out_specs=pl.BlockSpec((OUT_W, tile_n), lambda i: (0, i)),
        compiler_params=pltpu.CompilerParams(
            dimension_semantics=("parallel",),
            vmem_limit_bytes=32 * 1024 * 1024),
    )(x_packed, fused["wA1_t"], fused["wA2_t"], fused["bA_t"],
      fused["wB_t"], fused["bB_t"], fused["wv9_t"])

    multipole_prop = {
        "M0": out[0],                                # (N,)
        "M1": out[1:4].T,                            # (N, 3)
        "M2": out[4:13].T.reshape(N, 3, 3),          # (N, 3, 3)
    }
    # SumPooling(g, s[:, :outdim_s]) as a segment sum over the per-atom pooled row.
    gprop = jax.ops.segment_sum(out[13], graph_idx,
                                num_segments=num_graphs)[:, None]
    return multipole_prop, gprop


# ----------------------------------------------------------------------------
# Pure-JAX reference (mirror of the PyTorch forward, m_max_order=2)
# ----------------------------------------------------------------------------
def reference(feat, feat_v, graph_idx, num_graphs, p):
    h1 = _swish(feat @ p["w1a"] + p["b1a"])
    s = h1 @ p["w1b"] + p["b1b"]
    normv = jnp.linalg.norm(feat_v, axis=-1)
    x2 = jnp.concatenate([feat, normv], axis=-1)
    h2 = _swish(x2 @ p["w2a"] + p["b2a"])
    s2 = h2 @ p["w2b"] + p["b2b"]
    v = jnp.einsum("nfa,fc->nca", feat_v, p["wv"])            # (N, 3 chan, 3 sp)
    M0 = s[:, 1]
    M1 = s2[:, 0][:, None] * v[:, 0]
    I = jnp.eye(3, dtype=jnp.float32)
    M2 = (I[None] * s2[:, 1][:, None, None]
          + s2[:, 2][:, None, None] * (v[:, 1, :, None] * v[:, 2, None, :]
                                       + v[:, 1, None, :] * v[:, 2, :, None]))
    onehot = (graph_idx[None, :] == jnp.arange(num_graphs)[:, None]).astype(jnp.float32)
    gprop = onehot @ s[:, :1]
    return M0, M1, M2, gprop


def init_params(key):
    ks = jax.random.split(key, 7)
    scale = 0.1
    return {
        "w1a": scale * jax.random.normal(ks[0], (F, H1), jnp.float32),
        "b1a": scale * jax.random.normal(ks[1], (1, H1), jnp.float32),
        "w1b": scale * jax.random.normal(ks[2], (H1, OUT_S1), jnp.float32),
        "b1b": jnp.zeros((1, OUT_S1), jnp.float32),
        "w2a": scale * jax.random.normal(ks[3], (2 * F, H2), jnp.float32),
        "b2a": scale * jax.random.normal(ks[4], (1, H2), jnp.float32),
        "w2b": scale * jax.random.normal(ks[5], (H2, OUT_S2), jnp.float32),
        "b2b": jnp.zeros((1, OUT_S2), jnp.float32),
        "wv": scale * jax.random.normal(ks[6], (F, OUT_V), jnp.float32),
    }


if __name__ == "__main__":
    key = jax.random.PRNGKey(0)
    k_x, k_par = jax.random.split(key)

    N = 256                                  # atoms
    G = 4                                    # graphs in the batch
    # Producer emits the packed feature-major slab directly, so the kernel path
    # needs no wrapper-side relayout or padding.
    x_packed = jax.random.normal(k_x, (4 * F, N), jnp.float32)
    graph_idx = jnp.repeat(jnp.arange(G, dtype=jnp.int32), N // G)

    params = init_params(k_par)
    fused = fuse_params(params)              # one-time weight repack

    # tile_n=128 here just to exercise the multi-step pipelined grid at small N;
    # production default is 1024 (sweep 1024-2048).
    multipole_prop, global_prop = readout_ml2(x_packed, graph_idx, G, fused,
                                              tile_n=128)
    jax.block_until_ready((multipole_prop, global_prop))

    # sanity check vs pure-JAX reference in the original torch layout
    feat = x_packed[:F].T                                            # (N, 32)
    feat_v = jnp.transpose(x_packed[F:].reshape(3, F, N), (2, 1, 0))  # (N, 32, 3)
    M0_r, M1_r, M2_r, gp_r = reference(feat, feat_v, graph_idx, G, params)
    np.testing.assert_allclose(np.asarray(multipole_prop["M0"]), np.asarray(M0_r),
                               rtol=1e-2, atol=1e-2)
    np.testing.assert_allclose(np.asarray(multipole_prop["M1"]), np.asarray(M1_r),
                               rtol=1e-2, atol=1e-2)
    np.testing.assert_allclose(np.asarray(multipole_prop["M2"]), np.asarray(M2_r),
                               rtol=1e-2, atol=1e-2)
    np.testing.assert_allclose(np.asarray(global_prop), np.asarray(gp_r),
                               rtol=1e-2, atol=1e-2)

    print("KERNEL_OK")
</pallas_src>

<mosaic_0001>
module attributes {stable_mosaic.version = 11 : i64} {
  func.func @readout_ml2_kernel(%arg0: i32, %arg1: memref<128x128xf32, #tpu.memory_space<vmem>>, %arg2: memref<48x32xf32, #tpu.memory_space<vmem>>, %arg3: memref<48x32xf32, #tpu.memory_space<vmem>>, %arg4: memref<48x1xf32, #tpu.memory_space<vmem>>, %arg5: memref<5x48xf32, #tpu.memory_space<vmem>>, %arg6: memref<5x1xf32, #tpu.memory_space<vmem>>, %arg7: memref<9x96xf32, #tpu.memory_space<vmem>>, %arg8: memref<14x128xf32, #tpu.memory_space<vmem>>) attributes {dimension_semantics = [#tpu.dimension_semantics<parallel>], iteration_bounds = array<i64: 2>, scalar_prefetch = 0 : i64, scratch_operands = 0 : i64, tpu.core_type = #tpu.core_type<tc>, window_params = [{transform_indices = @transform_0, window_bounds = array<i64: 128, 128>}, {pipeline_mode = #tpu.pipeline_mode<synchronous>, transform_indices = @transform_1, window_bounds = array<i64: 48, 32>}, {pipeline_mode = #tpu.pipeline_mode<synchronous>, transform_indices = @transform_2, window_bounds = array<i64: 48, 32>}, {pipeline_mode = #tpu.pipeline_mode<synchronous>, transform_indices = @transform_3, window_bounds = array<i64: 48, 1>}, {pipeline_mode = #tpu.pipeline_mode<synchronous>, transform_indices = @transform_4, window_bounds = array<i64: 5, 48>}, {pipeline_mode = #tpu.pipeline_mode<synchronous>, transform_indices = @transform_5, window_bounds = array<i64: 5, 1>}, {pipeline_mode = #tpu.pipeline_mode<synchronous>, transform_indices = @transform_6, window_bounds = array<i64: 9, 96>}, {transform_indices = @transform_7, window_bounds = array<i64: 14, 128>}]} {
    %c0 = arith.constant 0 : index
    %c0_0 = arith.constant 0 : index
    %0 = vector.load %arg1[%c0, %c0_0] : memref<128x128xf32, #tpu.memory_space<vmem>>, vector<32x128xf32>
    %c32 = arith.constant 32 : index
    %c0_1 = arith.constant 0 : index
    %1 = vector.load %arg1[%c32, %c0_1] : memref<128x128xf32, #tpu.memory_space<vmem>>, vector<96x128xf32>
    %2 = vector.extract_strided_slice %1 {offsets = [0, 0], sizes = [32, 128], strides = [1, 1]} : vector<96x128xf32> to vector<32x128xf32>
    %3 = vector.extract_strided_slice %1 {offsets = [32, 0], sizes = [32, 128], strides = [1, 1]} : vector<96x128xf32> to vector<32x128xf32>
    %4 = vector.extract_strided_slice %1 {offsets = [64, 0], sizes = [32, 128], strides = [1, 1]} : vector<96x128xf32> to vector<32x128xf32>
    %5 = arith.mulf %2, %2 : vector<32x128xf32>
    %6 = arith.mulf %3, %3 : vector<32x128xf32>
    %7 = arith.addf %5, %6 : vector<32x128xf32>
    %8 = arith.mulf %4, %4 : vector<32x128xf32>
    %9 = arith.addf %7, %8 : vector<32x128xf32>
    %10 = math.sqrt %9 : vector<32x128xf32>
    %c0_2 = arith.constant 0 : index
    %c0_3 = arith.constant 0 : index
    %11 = vector.load %arg2[%c0_2, %c0_3] : memref<48x32xf32, #tpu.memory_space<vmem>>, vector<48x32xf32>
    %cst = arith.constant dense<0.000000e+00> : vector<48x128xf32>
    %12 = tpu.matmul %11, %0, %cst {dimension_numbers = #tpu.dot_dimension_numbers<[1], [0], [0], [1], [0, 0, 1, 1], [], []>} : vector<48x32xf32>, vector<32x128xf32>, vector<48x128xf32> -> vector<48x128xf32>
    %c0_4 = arith.constant 0 : index
    %c0_5 = arith.constant 0 : index
    %13 = vector.load %arg3[%c0_4, %c0_5] : memref<48x32xf32, #tpu.memory_space<vmem>>, vector<48x32xf32>
    %cst_6 = arith.constant dense<0.000000e+00> : vector<48x128xf32>
    %14 = tpu.matmul %13, %10, %cst_6 {dimension_numbers = #tpu.dot_dimension_numbers<[1], [0], [0], [1], [0, 0, 1, 1], [], []>} : vector<48x32xf32>, vector<32x128xf32>, vector<48x128xf32> -> vector<48x128xf32>
    %15 = arith.addf %12, %14 : vector<48x128xf32>
    %c0_7 = arith.constant 0 : index
    %c0_8 = arith.constant 0 : index
    %16 = vector.load %arg4[%c0_7, %c0_8] : memref<48x1xf32, #tpu.memory_space<vmem>>, vector<48x1xf32>
    %17 = vector.broadcast %16 : vector<48x1xf32> to vector<48x128xf32>
    %18 = arith.addf %15, %17 : vector<48x128xf32>
    %19 = arith.negf %18 : vector<48x128xf32>
    %20 = math.exp %19 : vector<48x128xf32>
    %cst_9 = arith.constant 1.000000e+00 : f32
    %21 = vector.broadcast %cst_9 : f32 to vector<48x128xf32>
    %22 = arith.addf %21, %20 : vector<48x128xf32>
    %23 = arith.divf %21, %22 : vector<48x128xf32>
    %24 = arith.mulf %18, %23 : vector<48x128xf32>
    %c0_10 = arith.constant 0 : index
    %c0_11 = arith.constant 0 : index
    %25 = vector.load %arg5[%c0_10, %c0_11] : memref<5x48xf32, #tpu.memory_space<vmem>>, vector<5x48xf32>
    %cst_12 = arith.constant dense<0.000000e+00> : vector<5x128xf32>
    %26 = tpu.matmul %25, %24, %cst_12 {dimension_numbers = #tpu.dot_dimension_numbers<[1], [0], [0], [1], [0, 0, 1, 1], [], []>} : vector<5x48xf32>, vector<48x128xf32>, vector<5x128xf32> -> vector<5x128xf32>
    %c0_13 = arith.constant 0 : index
    %c0_14 = arith.constant 0 : index
    %27 = vector.load %arg6[%c0_13, %c0_14] : memref<5x1xf32, #tpu.memory_space<vmem>>, vector<5x1xf32>
    %28 = vector.broadcast %27 : vector<5x1xf32> to vector<5x128xf32>
    %29 = arith.addf %26, %28 : vector<5x128xf32>
    %c0_15 = arith.constant 0 : index
    %c0_16 = arith.constant 0 : index
    %30 = vector.load %arg7[%c0_15, %c0_16] : memref<9x96xf32, #tpu.memory_space<vmem>>, vector<9x96xf32>
    %cst_17 = arith.constant dense<0.000000e+00> : vector<9x128xf32>
    %31 = tpu.matmul %30, %1, %cst_17 {dimension_numbers = #tpu.dot_dimension_numbers<[1], [0], [0], [1], [0, 0, 1, 1], [], []>} : vector<9x96xf32>, vector<96x128xf32>, vector<9x128xf32> -> vector<9x128xf32>
    %32 = vector.extract_strided_slice %29 {offsets = [0, 0], sizes = [1, 128], strides = [1, 1]} : vector<5x128xf32> to vector<1x128xf32>
    %33 = vector.extract_strided_slice %29 {offsets = [1, 0], sizes = [1, 128], strides = [1, 1]} : vector<5x128xf32> to vector<1x128xf32>
    %34 = vector.extract_strided_slice %29 {offsets = [2, 0], sizes = [1, 128], strides = [1, 1]} : vector<5x128xf32> to vector<1x128xf32>
    %35 = vector.extract_strided_slice %29 {offsets = [3, 0], sizes = [1, 128], strides = [1, 1]} : vector<5x128xf32> to vector<1x128xf32>
    %36 = vector.extract_strided_slice %29 {offsets = [4, 0], sizes = [1, 128], strides = [1, 1]} : vector<5x128xf32> to vector<1x128xf32>
    %37 = vector.extract_strided_slice %31 {offsets = [0, 0], sizes = [1, 128], strides = [1, 1]} : vector<9x128xf32> to vector<1x128xf32>
    %38 = vector.extract_strided_slice %31 {offsets = [1, 0], sizes = [1, 128], strides = [1, 1]} : vector<9x128xf32> to vector<1x128xf32>
    %39 = vector.extract_strided_slice %31 {offsets = [2, 0], sizes = [1, 128], strides = [1, 1]} : vector<9x128xf32> to vector<1x128xf32>
    %40 = vector.extract_strided_slice %31 {offsets = [3, 0], sizes = [1, 128], strides = [1, 1]} : vector<9x128xf32> to vector<1x128xf32>
    %41 = vector.extract_strided_slice %31 {offsets = [4, 0], sizes = [1, 128], strides = [1, 1]} : vector<9x128xf32> to vector<1x128xf32>
    %42 = vector.extract_strided_slice %31 {offsets = [5, 0], sizes = [1, 128], strides = [1, 1]} : vector<9x128xf32> to vector<1x128xf32>
    %43 = vector.extract_strided_slice %31 {offsets = [6, 0], sizes = [1, 128], strides = [1, 1]} : vector<9x128xf32> to vector<1x128xf32>
    %44 = vector.extract_strided_slice %31 {offsets = [7, 0], sizes = [1, 128], strides = [1, 1]} : vector<9x128xf32> to vector<1x128xf32>
    %45 = vector.extract_strided_slice %31 {offsets = [8, 0], sizes = [1, 128], strides = [1, 1]} : vector<9x128xf32> to vector<1x128xf32>
    %46 = arith.mulf %34, %37 : vector<1x128xf32>
    %47 = arith.mulf %34, %38 : vector<1x128xf32>
    %48 = arith.mulf %34, %39 : vector<1x128xf32>
    %49 = arith.mulf %40, %43 : vector<1x128xf32>
    %50 = arith.mulf %40, %43 : vector<1x128xf32>
    %51 = arith.addf %49, %50 : vector<1x128xf32>
    %52 = arith.mulf %40, %44 : vector<1x128xf32>
    %53 = arith.mulf %41, %43 : vector<1x128xf32>
    %54 = arith.addf %52, %53 : vector<1x128xf32>
    %55 = arith.mulf %40, %45 : vector<1x128xf32>
    %56 = arith.mulf %42, %43 : vector<1x128xf32>
    %57 = arith.addf %55, %56 : vector<1x128xf32>
    %58 = arith.mulf %41, %44 : vector<1x128xf32>
    %59 = arith.mulf %41, %44 : vector<1x128xf32>
    %60 = arith.addf %58, %59 : vector<1x128xf32>
    %61 = arith.mulf %41, %45 : vector<1x128xf32>
    %62 = arith.mulf %42, %44 : vector<1x128xf32>
    %63 = arith.addf %61, %62 : vector<1x128xf32>
    %64 = arith.mulf %42, %45 : vector<1x128xf32>
    %65 = arith.mulf %42, %45 : vector<1x128xf32>
    %66 = arith.addf %64, %65 : vector<1x128xf32>
    %67 = arith.mulf %36, %51 : vector<1x128xf32>
    %68 = arith.addf %67, %35 : vector<1x128xf32>
    %69 = arith.mulf %36, %54 : vector<1x128xf32>
    %70 = arith.mulf %36, %57 : vector<1x128xf32>
    %71 = arith.mulf %36, %54 : vector<1x128xf32>
    %72 = arith.mulf %36, %60 : vector<1x128xf32>
    %73 = arith.addf %72, %35 : vector<1x128xf32>
    %74 = arith.mulf %36, %63 : vector<1x128xf32>
    %75 = arith.mulf %36, %57 : vector<1x128xf32>
    %76 = arith.mulf %36, %63 : vector<1x128xf32>
    %77 = arith.mulf %36, %66 : vector<1x128xf32>
    %78 = arith.addf %77, %35 : vector<1x128xf32>
    %79 = tpu.concatenate %33, %46, %47, %48, %68, %69, %70, %71, %73, %74, %75, %76, %78, %32 in 0 : vector<1x128xf32>, vector<1x128xf32>, vector<1x128xf32>, vector<1x128xf32>, vector<1x128xf32>, vector<1x128xf32>, vector<1x128xf32>, vector<1x128xf32>, vector<1x128xf32>, vector<1x128xf32>, vector<1x128xf32>, vector<1x128xf32>, vector<1x128xf32>, vector<1x128xf32> -> vector<14x128xf32>
    %c0_18 = arith.constant 0 : index
    %c0_19 = arith.constant 0 : index
    %80 = vector.load %arg8[%c0_18, %c0_19] : memref<14x128xf32, #tpu.memory_space<vmem>>, vector<14x128xf32>
    tpu.vector_store %arg8[%c0_18, %c0_19], %79 {strides = array<i32>} : memref<14x128xf32, #tpu.memory_space<vmem>>, vector<14x128xf32>,
    return
  }
  func.func @transform_0(%arg0: i32) -> (i32, i32) {
    %c0_i32 = arith.constant 0 : i32
    %c0_i32_0 = arith.constant 0 : i32
    return %c0_i32, %arg0 : i32, i32
  }
  func.func @transform_1(%arg0: i32) -> (i32, i32) {
    %c0_i32 = arith.constant 0 : i32
    %c0_i32_0 = arith.constant 0 : i32
    %c0_i32_1 = arith.constant 0 : i32
    return %c0_i32, %c0_i32_0 : i32, i32
  }
  func.func @transform_2(%arg0: i32) -> (i32, i32) {
    %c0_i32 = arith.constant 0 : i32
    %c0_i32_0 = arith.constant 0 : i32
    %c0_i32_1 = arith.constant 0 : i32
    return %c0_i32, %c0_i32_0 : i32, i32
  }
  func.func @transform_3(%arg0: i32) -> (i32, i32) {
    %c0_i32 = arith.constant 0 : i32
    %c0_i32_0 = arith.constant 0 : i32
    %c0_i32_1 = arith.constant 0 : i32
    return %c0_i32, %c0_i32_0 : i32, i32
  }
  func.func @transform_4(%arg0: i32) -> (i32, i32) {
    %c0_i32 = arith.constant 0 : i32
    %c0_i32_0 = arith.constant 0 : i32
    %c0_i32_1 = arith.constant 0 : i32
    return %c0_i32, %c0_i32_0 : i32, i32
  }
  func.func @transform_5(%arg0: i32) -> (i32, i32) {
    %c0_i32 = arith.constant 0 : i32
    %c0_i32_0 = arith.constant 0 : i32
    %c0_i32_1 = arith.constant 0 : i32
    return %c0_i32, %c0_i32_0 : i32, i32
  }
  func.func @transform_6(%arg0: i32) -> (i32, i32) {
    %c0_i32 = arith.constant 0 : i32
    %c0_i32_0 = arith.constant 0 : i32
    %c0_i32_1 = arith.constant 0 : i32
    return %c0_i32, %c0_i32_0 : i32, i32
  }
  func.func @transform_7(%arg0: i32) -> (i32, i32) {
    %c0_i32 = arith.constant 0 : i32
    %c0_i32_0 = arith.constant 0 : i32
    return %c0_i32, %arg0 : i32, i32
  }
}

</mosaic_0001>

<llo_original>
// kernel: tpu_custom_call.1
$region0: #{tpu_custom_call.1}
  #allocation0 [shape = 'u32[]', space=smem, size = 0x4, offset = 0x4, fixed_abs, tag = 'smem constant byte address 0x4 - core index']
  #allocation1 [shape = 'u32[144,128]{1,0:T(1,128)}', space=vmem, size = 0x12000, scoped, tag = 'internal scratch']
  %s0 = inlined_call_operand.hbm [shape: f32[128,256], index: 0, kind: input, shape index: {}]
  %s1 = inlined_call_operand.vmem [shape: f32[48,32], index: 1, kind: input, shape index: {}]
  %s2 = inlined_call_operand.vmem [shape: f32[48,32], index: 2, kind: input, shape index: {}]
  %s3 = inlined_call_operand.vmem [shape: f32[48,1], index: 3, kind: input, shape index: {}]
  %s4 = inlined_call_operand.vmem [shape: f32[5,48], index: 4, kind: input, shape index: {}]
  %s5 = inlined_call_operand.vmem [shape: f32[5,1], index: 5, kind: input, shape index: {}]
  %s6 = inlined_call_operand.vmem [shape: f32[9,96], index: 6, kind: input, shape index: {}]
  %s7 = inlined_call_operand.hbm [shape: f32[14,256], index: 7, kind: output, shape index: {}]
  %s8 = sld [smem:[#allocation0]]
  $region65: #{tpu_custom_call.1} parent=0
    _
  %s10 = ssub.s32 1, %s8
  %s11 = scalar_select 0, %s10, %s8
  $region1: #{tpu_custom_call.1} parent=0
    #allocation2 [shape = 'u8[131072]{0}', space=vmem, size = 0x20000, scoped, tag = 'input window, operand 0']
    #allocation3 [shape = 's32[2]{0}', space=sflag, size = 0x8, scoped, tag = 'scoped memory for tpu_custom_call.1']
    #allocation4 [shape = 's32[2]{0}', space=sflag, size = 0x8, scoped, tag = 'scoped memory for tpu_custom_call.1']
    #allocation5 [shape = 'u8[16384]{0}', space=vmem, size = 0x4000, scoped, tag = 'output window, operand 0']
    %12 = vsyncpa [#allocation3], 0
    %s13 = scalar_lea.sflag [#allocation3], 1
    %14 = vsyncpa %s13, 0
    %15 = vsyncpa [#allocation4], 0
    %s16 = scalar_lea.sflag [#allocation4], 1
    %17 = vsyncpa %s16, 0
    loop: start=0, step=1, limit=4
    $region2: #{tpu_custom_call.1} parent=1 // loop_pre_header
      _
    $region3: #{tpu_custom_call.1} parent=1 // loop_header
      %s19 = sphi 0, %s23
      %p20 = scmp.ge.s32.totalorder %s19, 4
      %s29 = sphi 0, %s31
      %s32 = sphi 0, %s29
      %s33 = sphi 0, %s32
      %s49 = sphi 0, %s33
      %s53 = sphi 0, %s53
      %s55 = sphi 0, %s53
      %s56 = sphi 0, %s55
      %s70 = sphi 0, %s56
      %s74 = sphi 0, %s74
      %s76 = sphi 0, %s74
      %s77 = sphi 0, %s76
      %s91 = sphi 0, %s77
      %s95 = sphi 0, %s95
      %s97 = sphi 0, %s95
      %s98 = sphi 0, %s97
      %s112 = sphi 0, %s98
      %s116 = sphi 0, %s116
      %s118 = sphi 0, %s116
      %s119 = sphi 0, %s118
      %s133 = sphi 0, %s119
      %s137 = sphi 0, %s137
      %s139 = sphi 0, %s137
      %s140 = sphi 0, %s139
      %s154 = sphi 0, %s140
      %s158 = sphi 0, %s158
      %s160 = sphi 0, %s158
      %s161 = sphi 0, %s160
      %s175 = sphi 0, %s161
      %s181 = sphi 0, %s183
      %s184 = sphi 0, %s181
      %s185 = sphi 0, %s184
      %s201 = sphi 0, %s185
    $region4: #{tpu_custom_call.1} parent=1 // loop_header_branch
      %22 = sbr.rel (%p20) target = $region8
    $region5: #{tpu_custom_call.1} parent=1 // loop_body
      %s24 = ssub.s32 %s19, 1
      %s25 = ssub.s32 %s19, 2
      %s26 = sadd.s32 %s19, 1
      %s27 = ssub.s32 %s19, %s26
      %p28 = scmp.eq.s32.totalorder %s27, 0
      %s30 = sadd.s32 %s29, 1
      %s31 = scalar_select %p28, %s29, %s30
      %p34 = pneg %p28
      %p35 = scmp.eq.s32.totalorder %s19, 1
      %p36 = por %p34, %p35
      %p37 = scmp.ne.s32.totalorder %s29, %s32
      %p38 = scmp.eq.s32.totalorder %s19, 0
      %p39 = por %p37, %p38
      %p40 = scmp.ne.s32.totalorder %s29, %s32
      %p41 = scmp.eq.s32.totalorder %s24, 1
      %p42 = por %p40, %p41
      %p43 = scmp.ne.s32.totalorder %s32, %s33
      %p44 = scmp.eq.s32.totalorder %s24, 0
      %p45 = por %p43, %p44
      %p46 = scmp.ne.s32.totalorder %s32, %s33
      %p47 = scmp.eq.s32.totalorder %s25, 1
      %p48 = por %p46, %p47
      %p50 = scmp.ne.s32.totalorder %s33, %s49
      %p51 = scmp.eq.s32.totalorder %s25, 0
      %p52 = por %p50, %p51
      %s54 = sadd.s32 %s53, 1
      %p57 = scmp.eq.s32.totalorder %s19, 1
      %p58 = scmp.ne.s32.totalorder %s53, %s55
      %p59 = scmp.eq.s32.totalorder %s19, 0
      %p60 = por %p58, %p59
      %p61 = scmp.ne.s32.totalorder %s53, %s55
      %p62 = scmp.eq.s32.totalorder %s24, 1
      %p63 = por %p61, %p62
      %p64 = scmp.ne.s32.totalorder %s55, %s56
      %p65 = scmp.eq.s32.totalorder %s24, 0
      %p66 = por %p64, %p65
      %p67 = scmp.ne.s32.totalorder %s55, %s56
      %p68 = scmp.eq.s32.totalorder %s25, 1
      %p69 = por %p67, %p68
      %p71 = scmp.ne.s32.totalorder %s56, %s70
      %p72 = scmp.eq.s32.totalorder %s25, 0
      %p73 = por %p71, %p72
      %s75 = sadd.s32 %s74, 1
      %p78 = scmp.eq.s32.totalorder %s19, 1
      %p79 = scmp.ne.s32.totalorder %s74, %s76
      %p80 = scmp.eq.s32.totalorder %s19, 0
      %p81 = por %p79, %p80
      %p82 = scmp.ne.s32.totalorder %s74, %s76
      %p83 = scmp.eq.s32.totalorder %s24, 1
      %p84 = por %p82, %p83
      %p85 = scmp.ne.s32.totalorder %s76, %s77
      %p86 = scmp.eq.s32.totalorder %s24, 0
      %p87 = por %p85, %p86
      %p88 = scmp.ne.s32.totalorder %s76, %s77
      %p89 = scmp.eq.s32.totalorder %s25, 1
      %p90 = por %p88, %p89
      %p92 = scmp.ne.s32.totalorder %s77, %s91
      %p93 = scmp.eq.s32.totalorder %s25, 0
      %p94 = por %p92, %p93
      %s96 = sadd.s32 %s95, 1
      %p99 = scmp.eq.s32.totalorder %s19, 1
      %p100 = scmp.ne.s32.totalorder %s95, %s97
      %p101 = scmp.eq.s32.totalorder %s19, 0
      %p102 = por %p100, %p101
      %p103 = scmp.ne.s32.totalorder %s95, %s97
      %p104 = scmp.eq.s32.totalorder %s24, 1
      %p105 = por %p103, %p104
      %p106 = scmp.ne.s32.totalorder %s97, %s98
      %p107 = scmp.eq.s32.totalorder %s24, 0
      %p108 = por %p106, %p107
      %p109 = scmp.ne.s32.totalorder %s97, %s98
      %p110 = scmp.eq.s32.totalorder %s25, 1
      %p111 = por %p109, %p110
      %p113 = scmp.ne.s32.totalorder %s98, %s112
      %p114 = scmp.eq.s32.totalorder %s25, 0
      %p115 = por %p113, %p114
      %s117 = sadd.s32 %s116, 1
      %p120 = scmp.eq.s32.totalorder %s19, 1
      %p121 = scmp.ne.s32.totalorder %s116, %s118
      %p122 = scmp.eq.s32.totalorder %s19, 0
      %p123 = por %p121, %p122
      %p124 = scmp.ne.s32.totalorder %s116, %s118
      %p125 = scmp.eq.s32.totalorder %s24, 1
      %p126 = por %p124, %p125
      %p127 = scmp.ne.s32.totalorder %s118, %s119
      %p128 = scmp.eq.s32.totalorder %s24, 0
      %p129 = por %p127, %p128
      %p130 = scmp.ne.s32.totalorder %s118, %s119
      %p131 = scmp.eq.s32.totalorder %s25, 1
      %p132 = por %p130, %p131
      %p134 = scmp.ne.s32.totalorder %s119, %s133
      %p135 = scmp.eq.s32.totalorder %s25, 0
      %p136 = por %p134, %p135
      %s138 = sadd.s32 %s137, 1
      %p141 = scmp.eq.s32.totalorder %s19, 1
      %p142 = scmp.ne.s32.totalorder %s137, %s139
      %p143 = scmp.eq.s32.totalorder %s19, 0
      %p144 = por %p142, %p143
      %p145 = scmp.ne.s32.totalorder %s137, %s139
      %p146 = scmp.eq.s32.totalorder %s24, 1
      %p147 = por %p145, %p146
      %p148 = scmp.ne.s32.totalorder %s139, %s140
      %p149 = scmp.eq.s32.totalorder %s24, 0
      %p150 = por %p148, %p149
      %p151 = scmp.ne.s32.totalorder %s139, %s140
      %p152 = scmp.eq.s32.totalorder %s25, 1
      %p153 = por %p151, %p152
      %p155 = scmp.ne.s32.totalorder %s140, %s154
      %p156 = scmp.eq.s32.totalorder %s25, 0
      %p157 = por %p155, %p156
      %s159 = sadd.s32 %s158, 1
      %p162 = scmp.eq.s32.totalorder %s19, 1
      %p163 = scmp.ne.s32.totalorder %s158, %s160
      %p164 = scmp.eq.s32.totalorder %s19, 0
      %p165 = por %p163, %p164
      %p166 = scmp.ne.s32.totalorder %s158, %s160
      %p167 = scmp.eq.s32.totalorder %s24, 1
      %p168 = por %p166, %p167
      %p169 = scmp.ne.s32.totalorder %s160, %s161
      %p170 = scmp.eq.s32.totalorder %s24, 0
      %p171 = por %p169, %p170
      %p172 = scmp.ne.s32.totalorder %s160, %s161
      %p173 = scmp.eq.s32.totalorder %s25, 1
      %p174 = por %p172, %p173
      %p176 = scmp.ne.s32.totalorder %s161, %s175
      %p177 = scmp.eq.s32.totalorder %s25, 0
      %p178 = por %p176, %p177
      %s179 = ssub.s32 %s19, %s26
      %p180 = scmp.eq.s32.totalorder %s179, 0
      %s182 = sadd.s32 %s181, 1
      %s183 = scalar_select %p180, %s181, %s182
      %p186 = pneg %p180
      %p187 = scmp.eq.s32.totalorder %s19, 1
      %p188 = por %p186, %p187
      %p189 = scmp.ne.s32.totalorder %s181, %s184
      %p190 = scmp.eq.s32.totalorder %s19, 0
      %p191 = por %p189, %p190
      %p192 = scmp.ne.s32.totalorder %s181, %s184
      %p193 = scmp.eq.s32.totalorder %s24, 1
      %p194 = por %p192, %p193
      %p195 = scmp.ne.s32.totalorder %s184, %s185
      %p196 = scmp.eq.s32.totalorder %s24, 0
      %p197 = por %p195, %p196
      %p198 = scmp.ne.s32.totalorder %s184, %s185
      %p199 = scmp.eq.s32.totalorder %s25, 1
      %p200 = por %p198, %p199
      %p202 = scmp.ne.s32.totalorder %s185, %s201
      %p203 = scmp.eq.s32.totalorder %s25, 0
      %p204 = por %p202, %p203
      %p205 = scmp.le.s32.totalorder 1, %s19
      %p206 = scmp.lt.s32.totalorder %s19, 3
      %p207 = pnand %p205, %p206
      %p208 = pneg %p207
      // Predicated region
      $region9: #{tpu_custom_call.1} parent=5 // pred_check
        _
      $region10: #{tpu_custom_call.1} parent=5 // pred_check_branch
        %210 = sbr.rel (%p207) target = $region12
      $region11: #{tpu_custom_call.1} parent=5 // pred_region
        %s211 = ssub.s32 %s19, 1
        // Predicated region
        $region13: #{tpu_custom_call.1} parent=11 // pred_check
          %p212 = pneg %p66
        $region14: #{tpu_custom_call.1} parent=11 // pred_check_branch
          %214 = sbr.rel (%p212) target = $region16
        $region15: #{tpu_custom_call.1} parent=11 // pred_region
          _
        $region16: #{tpu_custom_call.1} parent=11 // pred_fallthru
          _
        // Predicated region
        $region17: #{tpu_custom_call.1} parent=11 // pred_check
          %p215 = pneg %p87
        $region18: #{tpu_custom_call.1} parent=11 // pred_check_branch
          %217 = sbr.rel (%p215) target = $region20
        $region19: #{tpu_custom_call.1} parent=11 // pred_region
          _
        $region20: #{tpu_custom_call.1} parent=11 // pred_fallthru
          _
        // Predicated region
        $region21: #{tpu_custom_call.1} parent=11 // pred_check
          %p218 = pneg %p108
        $region22: #{tpu_custom_call.1} parent=11 // pred_check_branch
          %220 = sbr.rel (%p218) target = $region24
        $region23: #{tpu_custom_call.1} parent=11 // pred_region
          _
        $region24: #{tpu_custom_call.1} parent=11 // pred_fallthru
          _
        // Predicated region
        $region25: #{tpu_custom_call.1} parent=11 // pred_check
          %p221 = pneg %p129
        $region26: #{tpu_custom_call.1} parent=11 // pred_check_branch
          %223 = sbr.rel (%p221) target = $region28
        $region27: #{tpu_custom_call.1} parent=11 // pred_region
          _
        $region28: #{tpu_custom_call.1} parent=11 // pred_fallthru
          _
        // Predicated region
        $region29: #{tpu_custom_call.1} parent=11 // pred_check
          %p224 = pneg %p150
        $region30: #{tpu_custom_call.1} parent=11 // pred_check_branch
          %226 = sbr.rel (%p224) target = $region32
        $region31: #{tpu_custom_call.1} parent=11 // pred_region
          _
        $region32: #{tpu_custom_call.1} parent=11 // pred_fallthru
          _
        // Predicated region
        $region33: #{tpu_custom_call.1} parent=11 // pred_check
          %p227 = pneg %p171
        $region34: #{tpu_custom_call.1} parent=11 // pred_check_branch
          %229 = sbr.rel (%p227) target = $region36
        $region35: #{tpu_custom_call.1} parent=11 // pred_region
          _
        $region36: #{tpu_custom_call.1} parent=11 // pred_fallthru
          _
      $region12: #{tpu_custom_call.1} parent=5 // pred_fallthru
        _
      %p230 = scmp.lt.s32.totalorder %s19, 2
      // Predicated region
      $region37: #{tpu_custom_call.1} parent=5 // pred_check
        %p231 = pneg %p230
      $region38: #{tpu_custom_call.1} parent=5 // pred_check_branch
        %233 = sbr.rel (%p231) target = $region40
      $region39: #{tpu_custom_call.1} parent=5 // pred_region
        // Predicated region
        $region41: #{tpu_custom_call.1} parent=39 // pred_check
          %p234 = pneg %p39
        $region42: #{tpu_custom_call.1} parent=39 // pred_check_branch
          %236 = sbr.rel (%p234) target = $region44
        $region43: #{tpu_custom_call.1} parent=39 // pred_region
          %s237 = sand.u32 %s29, 1
          %s238 = scalar_lea.sflag [#allocation3], %s237
          %s239 = sand.u32 %s29, 1
          %s240 = smul.addr %s239, 128
          %s241 = scalar_lea.vmem [#allocation2], %s240
          %s243 = ssub.s32 2048, 2048
          %244 = vsyncadd %s238, %s243
          %s245 = smul.addr %s19, 128
          %s246 = scalar_lea.hbm %s0, %s245
          %s247 = sshll.u32 %s241, 4
          %s248 = int_to_ptr.vmem [resolvable:$true] %s247
          %253 = dma.hbm_to_vmem [thread:$0]  %s246, 2048, %s248, %s238, 256, 128, 8
        $region44: #{tpu_custom_call.1} parent=39 // pred_fallthru
          _
      $region40: #{tpu_custom_call.1} parent=5 // pred_fallthru
        _
      %p254 = scmp.le.s32.totalorder 1, %s19
      %p255 = scmp.lt.s32.totalorder %s19, 3
      %p256 = pnand %p254, %p255
      %p257 = pneg %p256
      // Predicated region
      $region45: #{tpu_custom_call.1} parent=5 // pred_check
        _
      $region46: #{tpu_custom_call.1} parent=5 // pred_check_branch
        %259 = sbr.rel (%p256) target = $region48
      $region47: #{tpu_custom_call.1} parent=5 // pred_region
        %s260 = ssub.s32 %s19, 1
        %s261 = sand.u32 %s32, 1
        %s262 = scalar_lea.sflag [#allocation3], %s261
        %s263 = sand.u32 %s32, 1
        %s264 = smul.addr %s263, 128
        %s265 = scalar_lea.vmem [#allocation2], %s264
        // Predicated region
        $region49: #{tpu_custom_call.1} parent=47 // pred_check
          %p266 = pneg %p45
        $region50: #{tpu_custom_call.1} parent=47 // pred_check_branch
          %268 = sbr.rel (%p266) target = $region52
        $region51: #{tpu_custom_call.1} parent=47 // pred_region
          %269 = dma.done %s262, 2048
        $region52: #{tpu_custom_call.1} parent=47 // pred_fallthru
          _
        %s270 = sand.u32 %s32, 1
        %s271 = scalar_lea.sflag [#allocation3], %s270
        %s272 = sand.u32 %s32, 1
        %s273 = smul.addr %s272, 128
        %s274 = scalar_lea.vmem [#allocation2], %s273
        %p275 = pneg %p45
        %p276 = pneg %p42
        %p277 = pneg %p66
        %p278 = pneg %p63
        %p279 = pneg %p87
        %p280 = pneg %p84
        %p281 = pneg %p108
        %p282 = pneg %p105
        %p283 = pneg %p129
        %p284 = pneg %p126
        %p285 = pneg %p150
        %p286 = pneg %p147
        %p287 = pneg %p171
        %p288 = pneg %p168
        %p289 = pneg %p197
        %p290 = pneg %p194
        %s291 = sand.u32 %s184, 1
        %s292 = scalar_lea.sflag [#allocation4], %s291
        %s293 = sand.u32 %s184, 1
        %s294 = smul.addr %s293, 16
        %s295 = scalar_lea.vmem [#allocation5], %s294
        %v296 = vld [vmem:[%s265] sm:$0xff]
        %v297 = vld [vmem:[%s265 + $0x8] sm:$0xff]
        %v298 = vld [vmem:[%s265 + $0x10] sm:$0xff]
        %v299 = vld [vmem:[%s265 + $0x18] sm:$0xff]
        %v300 = vld [vmem:[%s265 + $0x20] sm:$0xff]
        %v301 = vld [vmem:[%s265 + $0x28] sm:$0xff]
        %v302 = vld [vmem:[%s265 + $0x30] sm:$0xff]
        %v303 = vld [vmem:[%s265 + $0x38] sm:$0xff]
        %v304 = vld [vmem:[%s265 + $0x40] sm:$0xff]
        %v305 = vld [vmem:[%s265 + $0x48] sm:$0xff]
        %v306 = vld [vmem:[%s265 + $0x50] sm:$0xff]
        %v307 = vld [vmem:[%s265 + $0x58] sm:$0xff]
        %v308 = vld [vmem:[%s265 + $0x60] sm:$0xff]
        %v309 = vld [vmem:[%s265 + $0x68] sm:$0xff]
        %v310 = vld [vmem:[%s265 + $0x70] sm:$0xff]
        %v311 = vld [vmem:[%s265 + $0x78] sm:$0xff]
        %v312 = vmul.f32 %v300, %v300
        %v313 = vmul.f32 %v301, %v301
        %v314 = vmul.f32 %v302, %v302
        %v315 = vmul.f32 %v303, %v303
        %v316 = vmul.f32 %v304, %v304
        %v317 = vmul.f32 %v305, %v305
        %v318 = vmul.f32 %v306, %v306
        %v319 = vmul.f32 %v307, %v307
        %v320 = vadd.f32 %v312, %v316
        %v321 = vadd.f32 %v313, %v317
        %v322 = vadd.f32 %v314, %v318
        %v323 = vadd.f32 %v315, %v319
        %v324 = vmul.f32 %v308, %v308
        %v325 = vmul.f32 %v309, %v309
        %v326 = vmul.f32 %v310, %v310
        %v327 = vmul.f32 %v311, %v311
        %v328 = vadd.f32 %v320, %v324
        %v329 = vadd.f32 %v321, %v325
        %v330 = vadd.f32 %v322, %v326
        %v331 = vadd.f32 %v323, %v327
        %v332 = vrsqrt.pop %v328
        %v333 = vmul.f32 %v328, %v332
        %vm334 = vcmp.eq.f32.partialorder %v328, inf
        %v335 = vsel %vm334, %v328, %v333
        %vm336 = vcmp.eq.f32.partialorder %v328, 0.0
        %v337 = vand.u32 %v328, 2147483648
        %v338 = vsel %vm336, %v337, %v335
        %v339 = vrsqrt.pop %v329
        %v340 = vmul.f32 %v329, %v339
        %vm341 = vcmp.eq.f32.partialorder %v329, inf
        %v342 = vsel %vm341, %v329, %v340
        %vm343 = vcmp.eq.f32.partialorder %v329, 0.0
        %v344 = vand.u32 %v329, 2147483648
        %v345 = vsel %vm343, %v344, %v342
        %v346 = vrsqrt.pop %v330
        %v347 = vmul.f32 %v330, %v346
        %vm348 = vcmp.eq.f32.partialorder %v330, inf
        %v349 = vsel %vm348, %v330, %v347
        %vm350 = vcmp.eq.f32.partialorder %v330, 0.0
        %v351 = vand.u32 %v330, 2147483648
        %v352 = vsel %vm350, %v351, %v349
        %v353 = vrsqrt.pop %v331
        %v354 = vmul.f32 %v331, %v353
        %vm355 = vcmp.eq.f32.partialorder %v331, inf
        %v356 = vsel %vm355, %v331, %v354
        %vm357 = vcmp.eq.f32.partialorder %v331, 0.0
        %v358 = vand.u32 %v331, 2147483648
        %v359 = vsel %vm357, %v358, %v356
        %v360 = vld [vmem:[%s1] sm:$0xff]
        %v361 = vld [vmem:[%s1 + $0x8] sm:$0xff]
        %v362 = vld [vmem:[%s1 + $0x10] sm:$0xff]
        %v363 = vld [vmem:[%s1 + $0x18] sm:$0xff]
        %v364 = vld [vmem:[%s1 + $0x20] sm:$0xff]
        %v365 = vld [vmem:[%s1 + $0x28] sm:$0xff]
        %v366 = vld [vmem:[%s2] sm:$0xff]
        %v367 = vld [vmem:[%s2 + $0x8] sm:$0xff]
        %v368 = vld [vmem:[%s2 + $0x10] sm:$0xff]
        %v369 = vld [vmem:[%s2 + $0x18] sm:$0xff]
        %v370 = vld [vmem:[%s2 + $0x20] sm:$0xff]
        %v371 = vld [vmem:[%s2 + $0x28] sm:$0xff]
        %vm372 = vcmask 261120
        %v374 = vsel %vm372, %v366, 0
        %v377 = vsel %vm372, %v367, 0
        %v380 = vsel %vm372, %v368, 0
        %v383 = vsel %vm372, %v369, 0
        %v386 = vsel %vm372, %v370, 0
        %v389 = vsel %vm372, %v371, 0
        %391 = vmatprep.subr.mxu0 0.0
        %392 = vmatpush1.msra.mxu0 %v338
        %393 = vmatprep.subr.mxu0 0.0
        %394 = vmatpush1.msra.mxu0 %v345
        %395 = vmatprep.subr.mxu0 0.0
        %396 = vmatpush1.msra.mxu0 %v352
        %397 = vmatprep.subr.mxu0 0.0
        %398 = vmatpush1.msra.mxu0 %v359
        %399 = vmatprep.subr.mxu0 0.0
        %400 = vmatpush1.msra.mxu0 0.0
        %401 = vmatprep.subr.mxu0 0.0
        %402 = vmatpush1.msra.mxu0 0.0
        %403 = vmatprep.subr.mxu0 0.0
        %404 = vmatpush1.msra.mxu0 0.0
        %405 = vmatprep.subr.mxu0 0.0
        %406 = vmatpush1.msra.mxu0 0.0
        %407 = vmatprep.subr.mxu0 0.0
        %408 = vmatpush1.msra.mxu0 0.0
        %409 = vmatprep.subr.mxu0 0.0
        %410 = vmatpush1.msra.mxu0 0.0
        %411 = vmatprep.subr.mxu0 0.0
        %412 = vmatpush1.msra.mxu0 0.0
        %413 = vmatprep.subr.mxu0 0.0
        %414 = vmatpush1.msra.mxu0 0.0
        %415 = vmatprep.subr.mxu0 0.0
        %416 = vmatpush1.msra.mxu0 0.0
        %417 = vmatprep.subr.mxu0 0.0
        %418 = vmatpush1.msra.mxu0 0.0
        %419 = vmatprep.subr.mxu0 0.0
        %420 = vmatpush1.msra.mxu0 0.0
        %421 = vmatprep.subr.mxu0 0.0
        %422 = vmatpush1.msra.mxu0 0.0
        %423 = vmatprep.subr.mxu0 0.0
        %424 = vmatpush1.msra.mxu0 0.0
        %425 = vmatprep.subr.mxu0 0.0
        %426 = vmatpush1.msra.mxu0 0.0
        %427 = vmatprep.subr.mxu0 0.0
        %428 = vmatpush1.msra.mxu0 0.0
        %429 = vmatprep.subr.mxu0 0.0
        %430 = vmatpush1.msra.mxu0 0.0
        %431 = vmatprep.subr.mxu0 0.0
        %432 = vmatpush1.msra.mxu0 0.0
        %433 = vmatprep.subr.mxu0 0.0
        %434 = vmatpush1.msra.mxu0 0.0
        %435 = vmatprep.subr.mxu0 0.0
        %436 = vmatpush1.msra.mxu0 0.0
        %437 = vmatprep.subr.mxu0 0.0
        %438 = vmatpush1.msra.mxu0 0.0
        %439 = vmatprep.subr.mxu0 0.0
        %440 = vmatpush1.msra.mxu0 0.0
        %441 = vmatprep.subr.mxu0 0.0
        %442 = vmatpush1.msra.mxu0 0.0
        %443 = vmatprep.subr.mxu0 0.0
        %444 = vmatpush1.msra.mxu0 0.0
        %445 = vmatprep.subr.mxu0 0.0
        %446 = vmatpush1.msra.mxu0 0.0
        %447 = vmatprep.subr.mxu0 0.0
        %448 = vmatpush1.msra.mxu0 0.0
        %449 = vmatprep.subr.mxu0 0.0
        %450 = vmatpush1.msra.mxu0 0.0
        %451 = vmatprep.subr.mxu0 0.0
        %452 = vmatpush1.msra.mxu0 0.0
        %453 = vmatprep.subr.mxu0 0.0
        %454 = vmatpush1.msra.mxu0 0.0
        %455 = vmatprep.mubr.f32.mxu0 0.0
        %456 = vmatmul.mubr.f32.gmra.mrb[0].mxu0 %v374
        %v457 = vpop.f32.mrb[0].mxu0
        %v458 = vadd.f32 0.0, %v457
        %v459 = vpop.f32.mrb[0].mxu0
        %460 = vmatprep.mubr.f32.mxu0 0.0
        %461 = vmatmul.mubr.f32.gmra.mrb[0].mxu0 %v377
        %v462 = vpop.f32.mrb[0].mxu0
        %v463 = vadd.f32 0.0, %v462
        %v464 = vpop.f32.mrb[0].mxu0
        %465 = vmatprep.mubr.f32.mxu0 0.0
        %466 = vmatmul.mubr.f32.gmra.mrb[0].mxu0 %v380
        %v467 = vpop.f32.mrb[0].mxu0
        %v468 = vadd.f32 0.0, %v467
        %v469 = vpop.f32.mrb[0].mxu0
        %470 = vmatprep.mubr.f32.mxu0 0.0
        %471 = vmatmul.mubr.f32.gmra.mrb[0].mxu0 %v383
        %v472 = vpop.f32.mrb[0].mxu0
        %v473 = vadd.f32 0.0, %v472
        %v474 = vpop.f32.mrb[0].mxu0
        %475 = vmatprep.mubr.f32.mxu0 0.0
        %476 = vmatmul.mubr.f32.gmra.mrb[0].mxu0 %v386
        %v477 = vpop.f32.mrb[0].mxu0
        %v478 = vadd.f32 0.0, %v477
        %v479 = vpop.f32.mrb[0].mxu0
        %480 = vmatprep.mubr.f32.mxu0 0.0
        %481 = vmatmul.mubr.f32.gmra.mrb[0].mxu0 %v389
        %v482 = vpop.f32.mrb[0].mxu0
        %v483 = vadd.f32 0.0, %v482
        %v484 = vpop.f32.mrb[0].mxu0
        %485 = vdwg.mxu0
        %v487 = vsel %vm372, %v360, 0
        %v490 = vsel %vm372, %v361, 0
        %v493 = vsel %vm372, %v362, 0
        %v496 = vsel %vm372, %v363, 0
        %v499 = vsel %vm372, %v364, 0
        %v502 = vsel %vm372, %v365, 0
        %504 = vmatprep.subr.mxu0 0.0
        %505 = vmatpush1.msra.mxu0 %v296
        %506 = vmatprep.subr.mxu0 0.0
        %507 = vmatpush1.msra.mxu0 %v297
        %508 = vmatprep.subr.mxu0 0.0
        %509 = vmatpush1.msra.mxu0 %v298
        %510 = vmatprep.subr.mxu0 0.0
        %511 = vmatpush1.msra.mxu0 %v299
        %512 = vmatprep.subr.mxu0 0.0
        %513 = vmatpush1.msra.mxu0 0.0
        %514 = vmatprep.subr.mxu0 0.0
        %515 = vmatpush1.msra.mxu0 0.0
        %516 = vmatprep.subr.mxu0 0.0
        %517 = vmatpush1.msra.mxu0 0.0
        %518 = vmatprep.subr.mxu0 0.0
        %519 = vmatpush1.msra.mxu0 0.0
        %520 = vmatprep.subr.mxu0 0.0
        %521 = vmatpush1.msra.mxu0 0.0
        %522 = vmatprep.subr.mxu0 0.0
        %523 = vmatpush1.msra.mxu0 0.0
        %524 = vmatprep.subr.mxu0 0.0
        %525 = vmatpush1.msra.mxu0 0.0
        %526 = vmatprep.subr.mxu0 0.0
        %527 = vmatpush1.msra.mxu0 0.0
        %528 = vmatprep.subr.mxu0 0.0
        %529 = vmatpush1.msra.mxu0 0.0
        %530 = vmatprep.subr.mxu0 0.0
        %531 = vmatpush1.msra.mxu0 0.0
        %532 = vmatprep.subr.mxu0 0.0
        %533 = vmatpush1.msra.mxu0 0.0
        %534 = vmatprep.subr.mxu0 0.0
        %535 = vmatpush1.msra.mxu0 0.0
        %536 = vmatprep.subr.mxu0 0.0
        %537 = vmatpush1.msra.mxu0 0.0
        %538 = vmatprep.subr.mxu0 0.0
        %539 = vmatpush1.msra.mxu0 0.0
        %540 = vmatprep.subr.mxu0 0.0
        %541 = vmatpush1.msra.mxu0 0.0
        %542 = vmatprep.subr.mxu0 0.0
        %543 = vmatpush1.msra.mxu0 0.0
        %544 = vmatprep.subr.mxu0 0.0
        %545 = vmatpush1.msra.mxu0 0.0
        %546 = vmatprep.subr.mxu0 0.0
        %547 = vmatpush1.msra.mxu0 0.0
        %548 = vmatprep.subr.mxu0 0.0
        %549 = vmatpush1.msra.mxu0 0.0
        %550 = vmatprep.subr.mxu0 0.0
        %551 = vmatpush1.msra.mxu0 0.0
        %552 = vmatprep.subr.mxu0 0.0
        %553 = vmatpush1.msra.mxu0 0.0
        %554 = vmatprep.subr.mxu0 0.0
        %555 = vmatpush1.msra.mxu0 0.0
        %556 = vmatprep.subr.mxu0 0.0
        %557 = vmatpush1.msra.mxu0 0.0
        %558 = vmatprep.subr.mxu0 0.0
        %559 = vmatpush1.msra.mxu0 0.0
        %560 = vmatprep.subr.mxu0 0.0
        %561 = vmatpush1.msra.mxu0 0.0
        %562 = vmatprep.subr.mxu0 0.0
        %563 = vmatpush1.msra.mxu0 0.0
        %564 = vmatprep.subr.mxu0 0.0
        %565 = vmatpush1.msra.mxu0 0.0
        %566 = vmatprep.subr.mxu0 0.0
        %567 = vmatpush1.msra.mxu0 0.0
        %568 = vmatprep.mubr.f32.mxu0 0.0
        %569 = vmatmul.mubr.f32.gmra.mrb[0].mxu0 %v487
        %v570 = vpop.f32.mrb[0].mxu0
        %v571 = vadd.f32 %v458, %v570
        %v572 = vpop.f32.mrb[0].mxu0
        %573 = vmatprep.mubr.f32.mxu0 0.0
        %574 = vmatmul.mubr.f32.gmra.mrb[0].mxu0 %v490
        %v575 = vpop.f32.mrb[0].mxu0
        %v576 = vadd.f32 %v463, %v575
        %v577 = vpop.f32.mrb[0].mxu0
        %578 = vmatprep.mubr.f32.mxu0 0.0
        %579 = vmatmul.mubr.f32.gmra.mrb[0].mxu0 %v493
        %v580 = vpop.f32.mrb[0].mxu0
        %v581 = vadd.f32 %v468, %v580
        %v582 = vpop.f32.mrb[0].mxu0
        %583 = vmatprep.mubr.f32.mxu0 0.0
        %584 = vmatmul.mubr.f32.gmra.mrb[0].mxu0 %v496
        %v585 = vpop.f32.mrb[0].mxu0
        %v586 = vadd.f32 %v473, %v585
        %v587 = vpop.f32.mrb[0].mxu0
        %588 = vmatprep.mubr.f32.mxu0 0.0
        %589 = vmatmul.mubr.f32.gmra.mrb[0].mxu0 %v499
        %v590 = vpop.f32.mrb[0].mxu0
        %v591 = vadd.f32 %v478, %v590
        %v592 = vpop.f32.mrb[0].mxu0
        %593 = vmatprep.mubr.f32.mxu0 0.0
        %594 = vmatmul.mubr.f32.gmra.mrb[0].mxu0 %v502
        %v595 = vpop.f32.mrb[0].mxu0
        %v596 = vadd.f32 %v483, %v595
        %v597 = vpop.f32.mrb[0].mxu0
        %598 = vdwg.mxu0
        %v599 = vld [vmem:[%s3] sm:$0xff]
        %v600 = vld [vmem:[%s3 + $0x8] sm:$0xff]
        %v601 = vld [vmem:[%s3 + $0x10] sm:$0xff]
        %v602 = vld [vmem:[%s3 + $0x18] sm:$0xff]
        %v603 = vld [vmem:[%s3 + $0x20] sm:$0xff]
        %v604 = vld [vmem:[%s3 + $0x28] sm:$0xff]
        %606 = vset.pattern.permute.xlu0 0
        %607 = vperm.xlu0 %606, %v599
        %v608 = vpop.permute.xlu0 %607
        %611 = vset.pattern.permute.xlu0 0
        %612 = vperm.xlu0 %611, %v600
        %v613 = vpop.permute.xlu0 %612
        %616 = vset.pattern.permute.xlu0 0
        %617 = vperm.xlu0 %616, %v601
        %v618 = vpop.permute.xlu0 %617
        %621 = vset.pattern.permute.xlu0 0
        %622 = vperm.xlu0 %621, %v602
        %v623 = vpop.permute.xlu0 %622
        %626 = vset.pattern.permute.xlu0 0
        %627 = vperm.xlu0 %626, %v603
        %v628 = vpop.permute.xlu0 %627
        %631 = vset.pattern.permute.xlu0 0
        %632 = vperm.xlu0 %631, %v604
        %v633 = vpop.permute.xlu0 %632
        %v635 = vadd.f32 %v571, %v608
        %v636 = vadd.f32 %v576, %v613
        %v637 = vadd.f32 %v581, %v618
        %v638 = vadd.f32 %v586, %v623
        %v639 = vadd.f32 %v591, %v628
        %v640 = vadd.f32 %v596, %v633
        %v641 = vxor.u32 %v635, 2147483648
        %v642 = vxor.u32 %v636, 2147483648
        %v643 = vxor.u32 %v637, 2147483648
        %v644 = vxor.u32 %v638, 2147483648
        %v645 = vxor.u32 %v639, 2147483648
        %v646 = vxor.u32 %v640, 2147483648
        %v647 = vmul.f32 %v641, 1.442695
        %v648 = vpow.pop %v647
        %v649 = vmul.f32 %v642, 1.442695
        %v650 = vpow.pop %v649
        %v651 = vmul.f32 %v643, 1.442695
        %v652 = vpow.pop %v651
        %v653 = vmul.f32 %v644, 1.442695
        %v654 = vpow.pop %v653
        %v655 = vmul.f32 %v645, 1.442695
        %v656 = vpow.pop %v655
        %v657 = vmul.f32 %v646, 1.442695
        %v658 = vpow.pop %v657
        %v659 = vadd.f32 %v648, 1.0
        %v660 = vadd.f32 %v650, 1.0
        %v661 = vadd.f32 %v652, 1.0
        %v662 = vadd.f32 %v654, 1.0
        %v663 = vadd.f32 %v656, 1.0
        %v664 = vadd.f32 %v658, 1.0
        %v665 = vrcp.pop %v659
        %v666 = vmul.f32 1.0, %v665
        %v667 = vrcp.pop %v660
        %v668 = vmul.f32 1.0, %v667
        %v669 = vrcp.pop %v661
        %v670 = vmul.f32 1.0, %v669
        %v671 = vrcp.pop %v662
        %v672 = vmul.f32 1.0, %v671
        %v673 = vrcp.pop %v663
        %v674 = vmul.f32 1.0, %v673
        %v675 = vrcp.pop %v664
        %v676 = vmul.f32 1.0, %v675
        %v677 = vmul.f32 %v635, %v666
        %v678 = vmul.f32 %v636, %v668
        %v679 = vmul.f32 %v637, %v670
        %v680 = vmul.f32 %v638, %v672
        %v681 = vmul.f32 %v639, %v674
        %v682 = vmul.f32 %v640, %v676
        %v683 = vld [vmem:[%s4] sm:$0x1f]
        %v684 = vld [vmem:[%s5] sm:$0x1f]
        %686 = vset.pattern.permute.xlu0 0
        %687 = vperm.xlu0 %686, %v684
        %v688 = vpop.permute.xlu0 %687
        %vm690 = vcmask 392192
        %v692 = vsel %vm690, %v683, 0
        %694 = vmatprep.subr.mxu0 0.0
        %695 = vmatpush1.msra.mxu0 %v677
        %696 = vmatprep.subr.mxu0 0.0
        %697 = vmatpush1.msra.mxu0 %v678
        %698 = vmatprep.subr.mxu0 0.0
        %699 = vmatpush1.msra.mxu0 %v679
        %700 = vmatprep.subr.mxu0 0.0
        %701 = vmatpush1.msra.mxu0 %v680
        %702 = vmatprep.subr.mxu0 0.0
        %703 = vmatpush1.msra.mxu0 %v681
        %704 = vmatprep.subr.mxu0 0.0
        %705 = vmatpush1.msra.mxu0 %v682
        %706 = vmatprep.subr.mxu0 0.0
        %707 = vmatpush1.msra.mxu0 0.0
        %708 = vmatprep.subr.mxu0 0.0
        %709 = vmatpush1.msra.mxu0 0.0
        %710 = vmatprep.subr.mxu0 0.0
        %711 = vmatpush1.msra.mxu0 0.0
        %712 = vmatprep.subr.mxu0 0.0
        %713 = vmatpush1.msra.mxu0 0.0
        %714 = vmatprep.subr.mxu0 0.0
        %715 = vmatpush1.msra.mxu0 0.0
        %716 = vmatprep.subr.mxu0 0.0
        %717 = vmatpush1.msra.mxu0 0.0
        %718 = vmatprep.subr.mxu0 0.0
        %719 = vmatpush1.msra.mxu0 0.0
        %720 = vmatprep.subr.mxu0 0.0
        %721 = vmatpush1.msra.mxu0 0.0
        %722 = vmatprep.subr.mxu0 0.0
        %723 = vmatpush1.msra.mxu0 0.0
        %724 = vmatprep.subr.mxu0 0.0
        %725 = vmatpush1.msra.mxu0 0.0
        %726 = vmatprep.subr.mxu0 0.0
        %727 = vmatpush1.msra.mxu0 0.0
        %728 = vmatprep.subr.mxu0 0.0
        %729 = vmatpush1.msra.mxu0 0.0
        %730 = vmatprep.subr.mxu0 0.0
        %731 = vmatpush1.msra.mxu0 0.0
        %732 = vmatprep.subr.mxu0 0.0
        %733 = vmatpush1.msra.mxu0 0.0
        %734 = vmatprep.subr.mxu0 0.0
        %735 = vmatpush1.msra.mxu0 0.0
        %736 = vmatprep.subr.mxu0 0.0
        %737 = vmatpush1.msra.mxu0 0.0
        %738 = vmatprep.subr.mxu0 0.0
        %739 = vmatpush1.msra.mxu0 0.0
        %740 = vmatprep.subr.mxu0 0.0
        %741 = vmatpush1.msra.mxu0 0.0
        %742 = vmatprep.subr.mxu0 0.0
        %743 = vmatpush1.msra.mxu0 0.0
        %744 = vmatprep.subr.mxu0 0.0
        %745 = vmatpush1.msra.mxu0 0.0
        %746 = vmatprep.subr.mxu0 0.0
        %747 = vmatpush1.msra.mxu0 0.0
        %748 = vmatprep.subr.mxu0 0.0
        %749 = vmatpush1.msra.mxu0 0.0
        %750 = vmatprep.subr.mxu0 0.0
        %751 = vmatpush1.msra.mxu0 0.0
        %752 = vmatprep.subr.mxu0 0.0
        %753 = vmatpush1.msra.mxu0 0.0
        %754 = vmatprep.subr.mxu0 0.0
        %755 = vmatpush1.msra.mxu0 0.0
        %756 = vmatprep.subr.mxu0 0.0
        %757 = vmatpush1.msra.mxu0 0.0
        %758 = vmatprep.mubr.f32.mxu0 0.0
        %759 = vmatmul.mubr.f32.gmra.mrb[0].mxu0 %v692
        %v760 = vpop.f32.mrb[0].mxu0
        %v761 = vadd.f32 %v688, %v760
        %v762 = vpop.f32.mrb[0].mxu0
        %763 = vdwg.mxu0
        %v764 = vld [vmem:[%s6] sm:$0xff]
        %v765 = vld [vmem:[%s6 + $0x8] sm:$0x1]
        %vm766 = vcmask 785408
        %v768 = vsel %vm766, %v764, 0
        %v771 = vsel %vm766, %v765, 0
        %773 = vmatprep.subr.mxu0 0.0
        %774 = vmatpush1.msra.mxu0 %v300
        %775 = vmatprep.subr.mxu0 0.0
        %776 = vmatpush1.msra.mxu0 %v301
        %777 = vmatprep.subr.mxu0 0.0
        %778 = vmatpush1.msra.mxu0 %v302
        %779 = vmatprep.subr.mxu0 0.0
        %780 = vmatpush1.msra.mxu0 %v303
        %781 = vmatprep.subr.mxu0 0.0
        %782 = vmatpush1.msra.mxu0 %v304
        %783 = vmatprep.subr.mxu0 0.0
        %784 = vmatpush1.msra.mxu0 %v305
        %785 = vmatprep.subr.mxu0 0.0
        %786 = vmatpush1.msra.mxu0 %v306
        %787 = vmatprep.subr.mxu0 0.0
        %788 = vmatpush1.msra.mxu0 %v307
        %789 = vmatprep.subr.mxu0 0.0
        %790 = vmatpush1.msra.mxu0 %v308
        %791 = vmatprep.subr.mxu0 0.0
        %792 = vmatpush1.msra.mxu0 %v309
        %793 = vmatprep.subr.mxu0 0.0
        %794 = vmatpush1.msra.mxu0 %v310
        %795 = vmatprep.subr.mxu0 0.0
        %796 = vmatpush1.msra.mxu0 %v311
        %797 = vmatprep.subr.mxu0 0.0
        %798 = vmatpush1.msra.mxu0 0.0
        %799 = vmatprep.subr.mxu0 0.0
        %800 = vmatpush1.msra.mxu0 0.0
        %801 = vmatprep.subr.mxu0 0.0
        %802 = vmatpush1.msra.mxu0 0.0
        %803 = vmatprep.subr.mxu0 0.0
        %804 = vmatpush1.msra.mxu0 0.0
        %805 = vmatprep.subr.mxu0 0.0
        %806 = vmatpush1.msra.mxu0 0.0
        %807 = vmatprep.subr.mxu0 0.0
        %808 = vmatpush1.msra.mxu0 0.0
        %809 = vmatprep.subr.mxu0 0.0
        %810 = vmatpush1.msra.mxu0 0.0
        %811 = vmatprep.subr.mxu0 0.0
        %812 = vmatpush1.msra.mxu0 0.0
        %813 = vmatprep.subr.mxu0 0.0
        %814 = vmatpush1.msra.mxu0 0.0
        %815 = vmatprep.subr.mxu0 0.0
        %816 = vmatpush1.msra.mxu0 0.0
        %817 = vmatprep.subr.mxu0 0.0
        %818 = vmatpush1.msra.mxu0 0.0
        %819 = vmatprep.subr.mxu0 0.0
        %820 = vmatpush1.msra.mxu0 0.0
        %821 = vmatprep.subr.mxu0 0.0
        %822 = vmatpush1.msra.mxu0 0.0
        %823 = vmatprep.subr.mxu0 0.0
        %824 = vmatpush1.msra.mxu0 0.0
        %825 = vmatprep.subr.mxu0 0.0
        %826 = vmatpush1.msra.mxu0 0.0
        %827 = vmatprep.subr.mxu0 0.0
        %828 = vmatpush1.msra.mxu0 0.0
        %829 = vmatprep.subr.mxu0 0.0
        %830 = vmatpush1.msra.mxu0 0.0
        %831 = vmatprep.subr.mxu0 0.0
        %832 = vmatpush1.msra.mxu0 0.0
        %833 = vmatprep.subr.mxu0 0.0
        %834 = vmatpush1.msra.mxu0 0.0
        %835 = vmatprep.subr.mxu0 0.0
        %836 = vmatpush1.msra.mxu0 0.0
        %837 = vmatprep.mubr.f32.mxu0 0.0
        %838 = vmatmul.mubr.f32.gmra.mrb[0].mxu0 %v768
        %v839 = vpop.f32.mrb[0].mxu0
        %v840 = vadd.f32 0.0, %v839
        %v841 = vpop.f32.mrb[0].mxu0
        %842 = vmatprep.mubr.f32.mxu0 0.0
        %843 = vmatmul.mubr.f32.gmra.mrb[0].mxu0 %v771
        %v844 = vpop.f32.mrb[0].mxu0
        %v845 = vadd.f32 0.0, %v844
        %v846 = vpop.f32.mrb[0].mxu0
        %847 = vdwg.mxu0
        %v849 = vrot.slane %v840, 6
        %v851 = vmul.f32 %v761, %v849
        %v852 = vrot.slane %v840, 7
        %v854 = vmul.f32 %v761, %v852
        %v855 = vmul.f32 %v761, %v840
        %v856 = vrot.slane %v840, 3
        %v858 = vmul.f32 %v840, %v856
        %v859 = vadd.f32 %v858, %v858
        %v860 = vrot.slane %v840, 4
        %v862 = vmul.f32 %v840, %v860
        %v863 = vrot.slane %v840, 2
        %v865 = vmul.f32 %v840, %v863
        %v867 = vrot.slane %v865, 1
        %v869 = vadd.f32 %v862, %v867
        %v871 = vrot.slane %v845, 5
        %v873 = vmul.f32 %v840, %v871
        %v874 = vrot.slane %v840, 1
        %v876 = vmul.f32 %v840, %v874
        %v878 = vrot.slane %v876, 2
        %v880 = vadd.f32 %v873, %v878
        %v881 = vrot.slane %v845, 4
        %v883 = vmul.f32 %v840, %v881
        %v884 = vadd.f32 %v883, %v867
        %v885 = vrot.slane %v845, 3
        %v887 = vmul.f32 %v840, %v885
        %v888 = vadd.f32 %v887, %v887
        %v890 = vrot.slane %v859, 7
        %v892 = vmul.f32 %v761, %v890
        %v894 = vrot.slane %v761, 7
        %v896 = vadd.f32 %v892, %v894
        %v898 = vrot.slane %v869, 7
        %v900 = vmul.f32 %v761, %v898
        %v902 = vrot.slane %v880, 7
        %v904 = vmul.f32 %v761, %v902
        %v905 = vmul.f32 %v761, %v859
        %v906 = vadd.f32 %v905, %v894
        %v907 = vmul.f32 %v761, %v884
        %v909 = vrot.slane %v888, 1
        %v911 = vmul.f32 %v761, %v909
        %v912 = vadd.f32 %v911, %v894
        %v913 = vrot.slane %v761, 1
        %v916 = vrot.slane %v851, 1
        %v919 = vrot.slane %v855, 7
        %v922 = vrot.slane %v900, 7
        %v925 = vrot.slane %v904, 6
        %v927 = vrot.slane %v900, 5
        %v930 = vrot.slane %v906, 4
        %v933 = vrot.slane %v907, 3
        %v935 = vrot.slane %v904, 2
        %v937 = vrot.slane %v907, 1
        %v939 = vrot.slane %v761, 3
        %vm941 = vcmask 1040384
        %v942 = vsel %vm941, %v913, %v916
        %vm943 = vcmask 1041408
        %v944 = vsel %vm943, %v942, %v854
        %vm945 = vcmask 1042432
        %v946 = vsel %vm945, %v944, %v919
        %vm947 = vcmask 1043456
        %v948 = vsel %vm947, %v946, %v896
        %vm949 = vcmask 1044480
        %v950 = vsel %vm949, %v948, %v922
        %vm951 = vcmask 1045504
        %v952 = vsel %vm951, %v950, %v925
        %vm953 = vcmask 1046528
        %v954 = vsel %vm953, %v952, %v927
        %v955 = vsel %vm941, %v930, %v933
        %v956 = vsel %vm943, %v955, %v935
        %v957 = vsel %vm945, %v956, %v937
        %v958 = vsel %vm947, %v957, %v912
        %v959 = vsel %vm949, %v958, %v939
        %960 = vst [vmem:[%s295] sm:$0xff] %v954
        %961 = vst [vmem:[%s295 + $0x8] sm:$0x3f] %v959
        %s962 = sand.u32 %s184, 1
        %s963 = scalar_lea.sflag [#allocation4], %s962
        %s964 = sand.u32 %s184, 1
        %s965 = smul.addr %s964, 16
        %s966 = scalar_lea.vmem [#allocation5], %s965
        // Predicated region
        $region53: #{tpu_custom_call.1} parent=47 // pred_check
          %p967 = pneg %p194
        $region54: #{tpu_custom_call.1} parent=47 // pred_check_branch
          %969 = sbr.rel (%p967) target = $region56
        $region55: #{tpu_custom_call.1} parent=47 // pred_region
          %s971 = ssub.s32 256, 256
          %972 = vsyncadd %s963, %s971
          %s973 = smul.addr %s24, 128
          %s974 = scalar_lea.hbm %s7, %s973
          %s975 = sshll.u32 %s966, 4
          %s976 = int_to_ptr.vmem [resolvable:$true] %s975
          %981 = dma.vmem_to_hbm [thread:$0]  %s976, 256, %s974, %s963, 128, 256, 8
        $region56: #{tpu_custom_call.1} parent=47 // pred_fallthru
          _
      $region48: #{tpu_custom_call.1} parent=5 // pred_fallthru
        _
      %p982 = scmp.le.s32.totalorder 2, %s19
      // Predicated region
      $region57: #{tpu_custom_call.1} parent=5 // pred_check
        %p983 = pneg %p982
      $region58: #{tpu_custom_call.1} parent=5 // pred_check_branch
        %985 = sbr.rel (%p983) target = $region60
      $region59: #{tpu_custom_call.1} parent=5 // pred_region
        %s986 = ssub.s32 %s19, 2
        // Predicated region
        $region61: #{tpu_custom_call.1} parent=59 // pred_check
          %p987 = pneg %p200
        $region62: #{tpu_custom_call.1} parent=59 // pred_check_branch
          %989 = sbr.rel (%p987) target = $region64
        $region63: #{tpu_custom_call.1} parent=59 // pred_region
          %s990 = sand.u32 %s185, 1
          %s991 = scalar_lea.sflag [#allocation4], %s990
          %s992 = sand.u32 %s185, 1
          %s993 = smul.addr %s992, 16
          %s994 = scalar_lea.vmem [#allocation5], %s993
          %995 = dma.done %s991, 256
        $region64: #{tpu_custom_call.1} parent=59 // pred_fallthru
          _
      $region60: #{tpu_custom_call.1} parent=5 // pred_fallthru
        _
    $region6: #{tpu_custom_call.1} parent=1 // loop_footer
      %s23 = sadd.s32 1, %s19
    $region7: #{tpu_custom_call.1} parent=1 // loop_footer_branch
      %18 = sbr.rel target = $region3
    $region8: #{tpu_custom_call.1} parent=1 // loop_exit
      _
    %996 = vsyncpa [#allocation3], 1
    %s997 = scalar_lea.sflag [#allocation3], 1
    %998 = vsyncpa %s997, 1
    %999 = vsyncpa [#allocation4], 1
    %s1000 = scalar_lea.sflag [#allocation4], 1
    %1001 = vsyncpa %s1000, 1

</llo_original>
